<compile_context>
chip_gen: v7x
topology: tpu7x:2x2x1
jax: 0.10.0
libtpu: 0.0.40
codegen_flags: <defaults>
</compile_context>

<pallas_src>
import jax
import jax.numpy as jnp
from jax.experimental import pallas as pl
from jax.experimental.pallas import tpu as pltpu

IN_FEATURES = 16
OUT_FEATURES = 2
FLAT = IN_FEATURES * IN_FEATURES          # 256
HID = OUT_FEATURES * IN_FEATURES          # 32
W2_COLS = 2 * OUT_FEATURES                # 4  ([v4[...,0] | v4[...,1]])
_MIN_BB = 32                              # sublane granularity (covers i8 tiles)


def _fused_kernel(x_ref, w1_ref, b1_ref, w2_ref, b2_ref, o_ref):
    # DMA'd in native dtype; cast on the VPU (kernel is memory-bound, VPU slack).
    x = x_ref[...].astype(jnp.float32)                              # (bb, 256)
    # Stage 1: h[b, k*16+i] = relu( sum_j x[b,j,i]*w[k,j] + b[k] )  == v3 (flat)
    h = jnp.maximum(
        jnp.dot(x, w1_ref[...], preferred_element_type=jnp.float32)
        + b1_ref[...],
        0.0)                                                        # (bb, 32)
    # Stage 2 (single fused dot): z[:, :2] = v4[:, :, 0], z[:, 2:] = v4[:, :, 1]
    z = jnp.dot(h, w2_ref[...], preferred_element_type=jnp.float32) \
        + b2_ref[...]                                               # (bb, 4)
    z0 = z[:, :OUT_FEATURES]
    z1 = z[:, OUT_FEATURES:]
    # argmax over relu(v4)'s size-2 last axis, first-occurrence tie-break:
    #   relu(z1) > relu(z0)  <=>  z1 > max(z0, 0)
    o_ref[...] = (z1 > jnp.maximum(z0, 0.0)).astype(jnp.int8)


def _build_folded_weights(w, b):
    """Fold both permutes of the original module into structured weights."""
    w = w.astype(jnp.float32)
    b = b.astype(jnp.float32)
    eye_i = jnp.eye(IN_FEATURES, dtype=jnp.float32)
    eye_k = jnp.eye(OUT_FEATURES, dtype=jnp.float32)
    # W1[j*16+i', k*16+i] = w[k, j] * (i' == i)
    w1 = jnp.einsum("kj,pi->jpki", w, eye_i).reshape(FLAT, HID)
    b1 = jnp.repeat(b, IN_FEATURES).reshape(1, HID)        # b1[k*16+i] = b[k]
    # W2[k*16+i, m*2+K] = (k == K) * w[m, i]   for m in {0, 1}
    w20 = jnp.einsum("kK,i->kiK", eye_k, w[0]).reshape(HID, OUT_FEATURES)
    w21 = jnp.einsum("kK,i->kiK", eye_k, w[1]).reshape(HID, OUT_FEATURES)
    w2 = jnp.concatenate([w20, w21], axis=1)               # (32, 4)
    b2 = jnp.repeat(b, OUT_FEATURES).reshape(1, W2_COLS)   # [b0, b0, b1, b1]
    return w1, b1, w2, b2


def _pick_block(B, block_b):
    """Batch tile: large to amortize per-step overhead, but >= 2 grid steps."""
    if B <= 2 * _MIN_BB:
        return B                                   # single full-array block
    bb = min(block_b, max(_MIN_BB, ((B // 2) // _MIN_BB) * _MIN_BB))
    return max(_MIN_BB, (bb // _MIN_BB) * _MIN_BB)


def model_forward(x, w, b, *, block_b=8192):
    """x: (B, 16, 16), w: (2, 16), b: (2,)  ->  (B, 2) int32 argmax indices.

    Note: torch.argmax returns int64; int32 is used here (TPU-native width).
    """
    B = x.shape[0]
    x_flat = x.reshape(B, FLAT)                     # free reshape, native dtype
    w1, b1, w2, b2 = _build_folded_weights(w, b)

    bb = _pick_block(B, block_b)
    grid = (pl.cdiv(B, bb),)

    # Per-step VMEM budget: double-buffered input + double-buffered padded
    # (bb, 128-lane) int8 output + resident weights.  Cap at v7x physical VMEM.
    x_item = jnp.dtype(x_flat.dtype).itemsize
    per_step = 2 * bb * FLAT * x_item + 2 * bb * 128
    weight_bytes = 2 * 4 * (FLAT * HID + HID + HID * W2_COLS + W2_COLS)
    vmem_limit = int(min(64 << 20,
                         max(32 << 20, per_step + weight_bytes + (4 << 20))))

    flops = B * (2 * FLAT * HID + 2 * HID * W2_COLS)
    bytes_accessed = (B * (FLAT * x_item + OUT_FEATURES)
                      + (FLAT * HID + HID + HID * W2_COLS + W2_COLS) * 4)

    out_i8 = pl.pallas_call(
        _fused_kernel,
        out_shape=jax.ShapeDtypeStruct((B, OUT_FEATURES), jnp.int8),
        grid=grid,
        in_specs=[
            pl.BlockSpec((bb, FLAT), lambda i: (i, 0)),
            pl.BlockSpec((FLAT, HID), lambda i: (0, 0)),
            pl.BlockSpec((1, HID), lambda i: (0, 0)),
            pl.BlockSpec((HID, W2_COLS), lambda i: (0, 0)),
            pl.BlockSpec((1, W2_COLS), lambda i: (0, 0)),
        ],
        out_specs=pl.BlockSpec((bb, OUT_FEATURES), lambda i: (i, 0)),
        compiler_params=pltpu.CompilerParams(
            dimension_semantics=("parallel",),
            vmem_limit_bytes=vmem_limit),
        cost_estimate=pl.CostEstimate(
            flops=flops, transcendentals=0, bytes_accessed=bytes_accessed),
    )(x_flat, w1, b1, w2, b2)
    # Tiny widen (B*2 bytes read) back to the documented int32 index dtype.
    return out_i8.astype(jnp.int32)


def reference_forward(x, w, b):
    """Pure-JAX reference mirroring the PyTorch module."""
    v1 = jnp.transpose(x, (0, 2, 1))
    x2 = jax.nn.relu(v1 @ w.T + b)
    v3 = jnp.transpose(x2, (0, 2, 1))
    x4 = jax.nn.relu(v3 @ w.T + b)
    return jnp.argmax(x4, axis=-1).astype(jnp.int32)


if __name__ == "__main__":
    key = jax.random.PRNGKey(0)
    kx, kw, kb, kx2 = jax.random.split(key, 4)

    # Deterministic Linear(16, 2) init, mimicking U(-1/sqrt(16), 1/sqrt(16)).
    bound = 1.0 / (IN_FEATURES ** 0.5)
    w = jax.random.uniform(kw, (OUT_FEATURES, IN_FEATURES),
                           minval=-bound, maxval=bound, dtype=jnp.float32)
    b = jax.random.uniform(kb, (OUT_FEATURES,),
                           minval=-bound, maxval=bound, dtype=jnp.float32)

    # Small case (matches the module's implied (B, 16, 16) input).
    B = 2
    x = jax.random.normal(kx, (B, IN_FEATURES, IN_FEATURES), dtype=jnp.float32)
    out = jax.block_until_ready(model_forward(x, w, b))
    ref = reference_forward(x, w, b)
    assert out.shape == (B, OUT_FEATURES), out.shape
    assert out.dtype == jnp.int32
    assert jnp.array_equal(out, ref), (out, ref)

    # Larger case exercising the batch-tiled, double-buffered grid path
    # (default block picking -> 2 steps; explicit block_b=64 -> 4 steps).
    B2 = 256
    x_big = jax.random.normal(kx2, (B2, IN_FEATURES, IN_FEATURES),
                              dtype=jnp.float32)
    ref_big = reference_forward(x_big, w, b)
    out_big = jax.block_until_ready(model_forward(x_big, w, b))
    assert jnp.array_equal(out_big, ref_big)
    out_big2 = jax.block_until_ready(model_forward(x_big, w, b, block_b=64))
    assert jnp.array_equal(out_big2, ref_big)

    print("KERNEL_OK")
</pallas_src>

<mosaic_0001>
module attributes {stable_mosaic.version = 11 : i64} {
  func.func @_fused_kernel(%arg0: i32, %arg1: memref<2x256xf32, #tpu.memory_space<vmem>>, %arg2: memref<256x32xf32, #tpu.memory_space<vmem>>, %arg3: memref<1x32xf32, #tpu.memory_space<vmem>>, %arg4: memref<32x4xf32, #tpu.memory_space<vmem>>, %arg5: memref<1x4xf32, #tpu.memory_space<vmem>>, %arg6: memref<2x2xi8, #tpu.memory_space<vmem>>) attributes {dimension_semantics = [#tpu.dimension_semantics<parallel>], iteration_bounds = array<i64: 1>, scalar_prefetch = 0 : i64, scratch_operands = 0 : i64, tpu.core_type = #tpu.core_type<tc>, window_params = [{transform_indices = @transform_0, window_bounds = array<i64: 2, 256>}, {pipeline_mode = #tpu.pipeline_mode<synchronous>, transform_indices = @transform_1, window_bounds = array<i64: 256, 32>}, {pipeline_mode = #tpu.pipeline_mode<synchronous>, transform_indices = @transform_2, window_bounds = array<i64: 1, 32>}, {pipeline_mode = #tpu.pipeline_mode<synchronous>, transform_indices = @transform_3, window_bounds = array<i64: 32, 4>}, {pipeline_mode = #tpu.pipeline_mode<synchronous>, transform_indices = @transform_4, window_bounds = array<i64: 1, 4>}, {transform_indices = @transform_5, window_bounds = array<i64: 2, 2>}]} {
    %c0 = arith.constant 0 : index
    %c0_0 = arith.constant 0 : index
    %0 = vector.load %arg1[%c0, %c0_0] : memref<2x256xf32, #tpu.memory_space<vmem>>, vector<2x256xf32>
    %c0_1 = arith.constant 0 : index
    %c0_2 = arith.constant 0 : index
    %1 = vector.load %arg2[%c0_1, %c0_2] : memref<256x32xf32, #tpu.memory_space<vmem>>, vector<256x32xf32>
    %cst = arith.constant dense<0.000000e+00> : vector<2x32xf32>
    %2 = tpu.matmul %0, %1, %cst {dimension_numbers = #tpu.dot_dimension_numbers<[1], [0], [0], [1], [0, 0, 1, 1], [], []>} : vector<2x256xf32>, vector<256x32xf32>, vector<2x32xf32> -> vector<2x32xf32>
    %c0_3 = arith.constant 0 : index
    %c0_4 = arith.constant 0 : index
    %3 = vector.load %arg3[%c0_3, %c0_4] : memref<1x32xf32, #tpu.memory_space<vmem>>, vector<1x32xf32>
    %4 = vector.broadcast %3 : vector<1x32xf32> to vector<2x32xf32>
    %5 = arith.addf %2, %4 : vector<2x32xf32>
    %cst_5 = arith.constant 0.000000e+00 : f32
    %6 = vector.broadcast %cst_5 : f32 to vector<2x32xf32>
    %7 = arith.maximumf %5, %6 : vector<2x32xf32>
    %c0_6 = arith.constant 0 : index
    %c0_7 = arith.constant 0 : index
    %8 = vector.load %arg4[%c0_6, %c0_7] : memref<32x4xf32, #tpu.memory_space<vmem>>, vector<32x4xf32>
    %cst_8 = arith.constant dense<0.000000e+00> : vector<2x4xf32>
    %9 = tpu.matmul %7, %8, %cst_8 {dimension_numbers = #tpu.dot_dimension_numbers<[1], [0], [0], [1], [0, 0, 1, 1], [], []>} : vector<2x32xf32>, vector<32x4xf32>, vector<2x4xf32> -> vector<2x4xf32>
    %c0_9 = arith.constant 0 : index
    %c0_10 = arith.constant 0 : index
    %10 = vector.load %arg5[%c0_9, %c0_10] : memref<1x4xf32, #tpu.memory_space<vmem>>, vector<1x4xf32>
    %11 = vector.broadcast %10 : vector<1x4xf32> to vector<2x4xf32>
    %12 = arith.addf %9, %11 : vector<2x4xf32>
    %13 = vector.extract_strided_slice %12 {offsets = [0, 0], sizes = [2, 2], strides = [1, 1]} : vector<2x4xf32> to vector<2x2xf32>
    %14 = vector.extract_strided_slice %12 {offsets = [0, 2], sizes = [2, 2], strides = [1, 1]} : vector<2x4xf32> to vector<2x2xf32>
    %cst_11 = arith.constant 0.000000e+00 : f32
    %15 = vector.broadcast %cst_11 : f32 to vector<2x2xf32>
    %16 = arith.maximumf %13, %15 : vector<2x2xf32>
    %17 = arith.cmpf ogt, %14, %16 : vector<2x2xf32>
    %18 = arith.extui %17 : vector<2x2xi1> to vector<2x2xi8>
    %c0_12 = arith.constant 0 : index
    %c0_13 = arith.constant 0 : index
    %19 = vector.load %arg6[%c0_12, %c0_13] : memref<2x2xi8, #tpu.memory_space<vmem>>, vector<2x2xi8>
    tpu.vector_store %arg6[%c0_12, %c0_13], %18 {strides = array<i32>} : memref<2x2xi8, #tpu.memory_space<vmem>>, vector<2x2xi8>,
    return
  }
  func.func @transform_0(%arg0: i32) -> (i32, i32) {
    %c0_i32 = arith.constant 0 : i32
    %c0_i32_0 = arith.constant 0 : i32
    return %arg0, %c0_i32 : i32, i32
  }
  func.func @transform_1(%arg0: i32) -> (i32, i32) {
    %c0_i32 = arith.constant 0 : i32
    %c0_i32_0 = arith.constant 0 : i32
    %c0_i32_1 = arith.constant 0 : i32
    return %c0_i32, %c0_i32_0 : i32, i32
  }
  func.func @transform_2(%arg0: i32) -> (i32, i32) {
    %c0_i32 = arith.constant 0 : i32
    %c0_i32_0 = arith.constant 0 : i32
    %c0_i32_1 = arith.constant 0 : i32
    return %c0_i32, %c0_i32_0 : i32, i32
  }
  func.func @transform_3(%arg0: i32) -> (i32, i32) {
    %c0_i32 = arith.constant 0 : i32
    %c0_i32_0 = arith.constant 0 : i32
    %c0_i32_1 = arith.constant 0 : i32
    return %c0_i32, %c0_i32_0 : i32, i32
  }
  func.func @transform_4(%arg0: i32) -> (i32, i32) {
    %c0_i32 = arith.constant 0 : i32
    %c0_i32_0 = arith.constant 0 : i32
    %c0_i32_1 = arith.constant 0 : i32
    return %c0_i32, %c0_i32_0 : i32, i32
  }
  func.func @transform_5(%arg0: i32) -> (i32, i32) {
    %c0_i32 = arith.constant 0 : i32
    %c0_i32_0 = arith.constant 0 : i32
    return %arg0, %c0_i32 : i32, i32
  }
}

</mosaic_0001>

<llo_original>
// kernel: tpu_custom_call.1
$region0: #{tpu_custom_call.1}
  #allocation0 [shape = 'u32[]', space=smem, size = 0x4, offset = 0x4, fixed_abs, tag = 'smem constant byte address 0x4 - core index']
  #allocation1 [shape = 'u32[144,128]{1,0:T(1,128)}', space=vmem, size = 0x12000, scoped, tag = 'internal scratch']
  %s0 = inlined_call_operand.vmem [shape: f32[2,256], index: 0, kind: input, shape index: {}]
  %s1 = inlined_call_operand.vmem [shape: f32[256,32], index: 1, kind: input, shape index: {}]
  %s2 = inlined_call_operand.vmem [shape: f32[1,32], index: 2, kind: input, shape index: {}]
  %s3 = inlined_call_operand.vmem [shape: f32[32,4], index: 3, kind: input, shape index: {}]
  %s4 = inlined_call_operand.vmem [shape: f32[1,4], index: 4, kind: input, shape index: {}]
  %s5 = inlined_call_operand.hbm [shape: s8[2,2], index: 5, kind: output, shape index: {}]
  %s6 = sld [smem:[#allocation0]]
  $region30: #{tpu_custom_call.1} parent=0
    _
  %s8 = ssub.s32 1, %s6
  %s9 = scalar_select 0, %s8, %s6
  $region1: #{tpu_custom_call.1} parent=0
    #allocation2 [shape = 'u8[512]{0}', space=vmem, size = 0x400, scoped, tag = 'output window, operand 0, single buffered']
    #allocation3 [shape = 's32[1]{0}', space=sflag, size = 0x4, scoped, tag = 'scoped memory for tpu_custom_call.1']
    %10 = vsyncpa [#allocation3], 0
    // Predicated region
    $region2: #{tpu_custom_call.1} parent=1 // pred_check
      _
    $region3: #{tpu_custom_call.1} parent=1 // pred_check_branch
      %12 = sbr.rel (0) target = $region5
    $region4: #{tpu_custom_call.1} parent=1 // pred_region
      _
    $region5: #{tpu_custom_call.1} parent=1 // pred_fallthru
      _
    // Predicated region
    $region6: #{tpu_custom_call.1} parent=1 // pred_check
      _
    $region7: #{tpu_custom_call.1} parent=1 // pred_check_branch
      %14 = sbr.rel (0) target = $region9
    $region8: #{tpu_custom_call.1} parent=1 // pred_region
      _
    $region9: #{tpu_custom_call.1} parent=1 // pred_fallthru
      _
    // Predicated region
    $region10: #{tpu_custom_call.1} parent=1 // pred_check
      _
    $region11: #{tpu_custom_call.1} parent=1 // pred_check_branch
      %16 = sbr.rel (0) target = $region13
    $region12: #{tpu_custom_call.1} parent=1 // pred_region
      _
    $region13: #{tpu_custom_call.1} parent=1 // pred_fallthru
      _
    // Predicated region
    $region14: #{tpu_custom_call.1} parent=1 // pred_check
      _
    $region15: #{tpu_custom_call.1} parent=1 // pred_check_branch
      %18 = sbr.rel (0) target = $region17
    $region16: #{tpu_custom_call.1} parent=1 // pred_region
      _
    $region17: #{tpu_custom_call.1} parent=1 // pred_fallthru
      _
    // Predicated region
    $region18: #{tpu_custom_call.1} parent=1 // pred_check
      _
    $region19: #{tpu_custom_call.1} parent=1 // pred_check_branch
      %20 = sbr.rel (0) target = $region21
    $region20: #{tpu_custom_call.1} parent=1 // pred_region
      _
    $region21: #{tpu_custom_call.1} parent=1 // pred_fallthru
      _
    %v23 = vld [vmem:[%s0] sm:$0xf]
    %v24 = vld [vmem:[%s1] sm:$0xff]
    %v25 = vld [vmem:[%s1 + $0x8] sm:$0xff]
    %v26 = vld [vmem:[%s1 + $0x10] sm:$0xff]
    %v27 = vld [vmem:[%s1 + $0x18] sm:$0xff]
    %v28 = vld [vmem:[%s1 + $0x20] sm:$0xff]
    %v29 = vld [vmem:[%s1 + $0x28] sm:$0xff]
    %v30 = vld [vmem:[%s1 + $0x30] sm:$0xff]
    %v31 = vld [vmem:[%s1 + $0x38] sm:$0xff]
    %v32 = vld [vmem:[%s1 + $0x40] sm:$0xff]
    %v33 = vld [vmem:[%s1 + $0x48] sm:$0xff]
    %v34 = vld [vmem:[%s1 + $0x50] sm:$0xff]
    %v35 = vld [vmem:[%s1 + $0x58] sm:$0xff]
    %v36 = vld [vmem:[%s1 + $0x60] sm:$0xff]
    %v37 = vld [vmem:[%s1 + $0x68] sm:$0xff]
    %v38 = vld [vmem:[%s1 + $0x70] sm:$0xff]
    %v39 = vld [vmem:[%s1 + $0x78] sm:$0xff]
    %v40 = vld [vmem:[%s1 + $0x80] sm:$0xff]
    %v41 = vld [vmem:[%s1 + $0x88] sm:$0xff]
    %v42 = vld [vmem:[%s1 + $0x90] sm:$0xff]
    %v43 = vld [vmem:[%s1 + $0x98] sm:$0xff]
    %v44 = vld [vmem:[%s1 + $0xa0] sm:$0xff]
    %v45 = vld [vmem:[%s1 + $0xa8] sm:$0xff]
    %v46 = vld [vmem:[%s1 + $0xb0] sm:$0xff]
    %v47 = vld [vmem:[%s1 + $0xb8] sm:$0xff]
    %v48 = vld [vmem:[%s1 + $0xc0] sm:$0xff]
    %v49 = vld [vmem:[%s1 + $0xc8] sm:$0xff]
    %v50 = vld [vmem:[%s1 + $0xd0] sm:$0xff]
    %v51 = vld [vmem:[%s1 + $0xd8] sm:$0xff]
    %v52 = vld [vmem:[%s1 + $0xe0] sm:$0xff]
    %v53 = vld [vmem:[%s1 + $0xe8] sm:$0xff]
    %v54 = vld [vmem:[%s1 + $0xf0] sm:$0xff]
    %v55 = vld [vmem:[%s1 + $0xf8] sm:$0xff]
    %v56 = vld [vmem:[%s2] sm:$0x1]
    %v58 = vlaneseq
    %v59 = vshrl.u32 %v58, 7
    %v60 = vsub.s32 0, %v59
    %v61 = vrot.slane %v56, %v60
    %v65 = vunpack.c.l.s4 1983009808
    %v66 = vunpack.c.0.s8 %v65
    %v67 = vlaneseq
    %v68 = vshrl.u32 %v67, 7
    %v69 = vsub.s32 %v66, %v68
    %v70 = vrot.slane %v23, %v69
    %v71 = vcombine.high %v70, %v70
    %74 = vmatprep.subr.mxu0 0.0
    %75 = vmatpush1.msra.mxu0 %v24
    %76 = vmatprep.subr.mxu0 0.0
    %77 = vmatpush1.msra.mxu0 %v25
    %78 = vmatprep.subr.mxu0 0.0
    %79 = vmatpush1.msra.mxu0 %v26
    %80 = vmatprep.subr.mxu0 0.0
    %81 = vmatpush1.msra.mxu0 %v27
    %82 = vmatprep.subr.mxu0 0.0
    %83 = vmatpush1.msra.mxu0 %v28
    %84 = vmatprep.subr.mxu0 0.0
    %85 = vmatpush1.msra.mxu0 %v29
    %86 = vmatprep.subr.mxu0 0.0
    %87 = vmatpush1.msra.mxu0 %v30
    %88 = vmatprep.subr.mxu0 0.0
    %89 = vmatpush1.msra.mxu0 %v31
    %90 = vmatprep.subr.mxu0 0.0
    %91 = vmatpush1.msra.mxu0 %v32
    %92 = vmatprep.subr.mxu0 0.0
    %93 = vmatpush1.msra.mxu0 %v33
    %94 = vmatprep.subr.mxu0 0.0
    %95 = vmatpush1.msra.mxu0 %v34
    %96 = vmatprep.subr.mxu0 0.0
    %97 = vmatpush1.msra.mxu0 %v35
    %98 = vmatprep.subr.mxu0 0.0
    %99 = vmatpush1.msra.mxu0 %v36
    %100 = vmatprep.subr.mxu0 0.0
    %101 = vmatpush1.msra.mxu0 %v37
    %102 = vmatprep.subr.mxu0 0.0
    %103 = vmatpush1.msra.mxu0 %v38
    %104 = vmatprep.subr.mxu0 0.0
    %105 = vmatpush1.msra.mxu0 %v39
    %106 = vmatprep.subr.mxu0 0.0
    %107 = vmatpush1.msra.mxu0 %v40
    %108 = vmatprep.subr.mxu0 0.0
    %109 = vmatpush1.msra.mxu0 %v41
    %110 = vmatprep.subr.mxu0 0.0
    %111 = vmatpush1.msra.mxu0 %v42
    %112 = vmatprep.subr.mxu0 0.0
    %113 = vmatpush1.msra.mxu0 %v43
    %114 = vmatprep.subr.mxu0 0.0
    %115 = vmatpush1.msra.mxu0 %v44
    %116 = vmatprep.subr.mxu0 0.0
    %117 = vmatpush1.msra.mxu0 %v45
    %118 = vmatprep.subr.mxu0 0.0
    %119 = vmatpush1.msra.mxu0 %v46
    %120 = vmatprep.subr.mxu0 0.0
    %121 = vmatpush1.msra.mxu0 %v47
    %122 = vmatprep.subr.mxu0 0.0
    %123 = vmatpush1.msra.mxu0 %v48
    %124 = vmatprep.subr.mxu0 0.0
    %125 = vmatpush1.msra.mxu0 %v49
    %126 = vmatprep.subr.mxu0 0.0
    %127 = vmatpush1.msra.mxu0 %v50
    %128 = vmatprep.subr.mxu0 0.0
    %129 = vmatpush1.msra.mxu0 %v51
    %130 = vmatprep.subr.mxu0 0.0
    %131 = vmatpush1.msra.mxu0 %v52
    %132 = vmatprep.subr.mxu0 0.0
    %133 = vmatpush1.msra.mxu0 %v53
    %134 = vmatprep.subr.mxu0 0.0
    %135 = vmatpush1.msra.mxu0 %v54
    %136 = vmatprep.subr.mxu0 0.0
    %137 = vmatpush1.msra.mxu0 %v55
    %138 = vmatprep.mubr.f32.mxu0 %v71
    %139 = vmatmul.mubr.f32.gmra.mrb[0].mxu0 %v70
    %v140 = vpop.f32.mrb[0].mxu0
    %v141 = vadd.f32 %v61, %v140
    %v142 = vpop.f32.mrb[0].mxu0
    %143 = vdwg.mxu0
    %v144 = vmax.f32 %v141, 0.0
    %v145 = vld [vmem:[%s3] sm:$0xff]
    %v146 = vld [vmem:[%s3 + $0x8] sm:$0xff]
    %v147 = vld [vmem:[%s3 + $0x10] sm:$0xff]
    %v148 = vld [vmem:[%s3 + $0x18] sm:$0xff]
    %v149 = vld [vmem:[%s4] sm:$0x1]
    %v151 = vlaneseq
    %v152 = vshrl.u32 %v151, 7
    %v153 = vsub.s32 0, %v152
    %v154 = vrot.slane %v149, %v153
    %vm156 = vcmask 261120
    %v158 = vsel %vm156, %v144, 0
    %160 = vmatprep.subr.mxu0 0.0
    %161 = vmatpush1.msra.mxu0 %v145
    %162 = vmatprep.subr.mxu0 0.0
    %163 = vmatpush1.msra.mxu0 %v146
    %164 = vmatprep.subr.mxu0 0.0
    %165 = vmatpush1.msra.mxu0 %v147
    %166 = vmatprep.subr.mxu0 0.0
    %167 = vmatpush1.msra.mxu0 %v148
    %168 = vmatprep.subr.mxu0 0.0
    %169 = vmatpush1.msra.mxu0 0.0
    %170 = vmatprep.subr.mxu0 0.0
    %171 = vmatpush1.msra.mxu0 0.0
    %172 = vmatprep.subr.mxu0 0.0
    %173 = vmatpush1.msra.mxu0 0.0
    %174 = vmatprep.subr.mxu0 0.0
    %175 = vmatpush1.msra.mxu0 0.0
    %176 = vmatprep.subr.mxu0 0.0
    %177 = vmatpush1.msra.mxu0 0.0
    %178 = vmatprep.subr.mxu0 0.0
    %179 = vmatpush1.msra.mxu0 0.0
    %180 = vmatprep.subr.mxu0 0.0
    %181 = vmatpush1.msra.mxu0 0.0
    %182 = vmatprep.subr.mxu0 0.0
    %183 = vmatpush1.msra.mxu0 0.0
    %184 = vmatprep.subr.mxu0 0.0
    %185 = vmatpush1.msra.mxu0 0.0
    %186 = vmatprep.subr.mxu0 0.0
    %187 = vmatpush1.msra.mxu0 0.0
    %188 = vmatprep.subr.mxu0 0.0
    %189 = vmatpush1.msra.mxu0 0.0
    %190 = vmatprep.subr.mxu0 0.0
    %191 = vmatpush1.msra.mxu0 0.0
    %192 = vmatprep.subr.mxu0 0.0
    %193 = vmatpush1.msra.mxu0 0.0
    %194 = vmatprep.subr.mxu0 0.0
    %195 = vmatpush1.msra.mxu0 0.0
    %196 = vmatprep.subr.mxu0 0.0
    %197 = vmatpush1.msra.mxu0 0.0
    %198 = vmatprep.subr.mxu0 0.0
    %199 = vmatpush1.msra.mxu0 0.0
    %200 = vmatprep.subr.mxu0 0.0
    %201 = vmatpush1.msra.mxu0 0.0
    %202 = vmatprep.subr.mxu0 0.0
    %203 = vmatpush1.msra.mxu0 0.0
    %204 = vmatprep.subr.mxu0 0.0
    %205 = vmatpush1.msra.mxu0 0.0
    %206 = vmatprep.subr.mxu0 0.0
    %207 = vmatpush1.msra.mxu0 0.0
    %208 = vmatprep.subr.mxu0 0.0
    %209 = vmatpush1.msra.mxu0 0.0
    %210 = vmatprep.subr.mxu0 0.0
    %211 = vmatpush1.msra.mxu0 0.0
    %212 = vmatprep.subr.mxu0 0.0
    %213 = vmatpush1.msra.mxu0 0.0
    %214 = vmatprep.subr.mxu0 0.0
    %215 = vmatpush1.msra.mxu0 0.0
    %216 = vmatprep.subr.mxu0 0.0
    %217 = vmatpush1.msra.mxu0 0.0
    %218 = vmatprep.subr.mxu0 0.0
    %219 = vmatpush1.msra.mxu0 0.0
    %220 = vmatprep.subr.mxu0 0.0
    %221 = vmatpush1.msra.mxu0 0.0
    %222 = vmatprep.subr.mxu0 0.0
    %223 = vmatpush1.msra.mxu0 0.0
    %224 = vmatprep.mubr.f32.mxu0 0.0
    %225 = vmatmul.mubr.f32.gmra.mrb[0].mxu0 %v158
    %v226 = vpop.f32.mrb[0].mxu0
    %v227 = vadd.f32 %v154, %v226
    %v228 = vpop.f32.mrb[0].mxu0
    %229 = vdwg.mxu0
    %v230 = vmax.f32 %v227, 0.0
    %232 = vrot.lane.b32.xlu0 %v230, 2
    %v233 = vpop.permute.xlu0 %232
    %vm235 = vcmp.gt.f32.partialorder %v227, %v233
    %vm236 = vmpackc.low %vm235, %vm235
    %vm237 = vmpackc.even %vm236, %vm236
    %v238 = vsel %vm237, 16843009, 0
    %v239 = vunpack.c.0.s8 %v238
    %v240 = vpack.c.b16 %v239, %v239
    %v241 = vpack.c.b8 %v240, %v240
    %242 = vrot.lane.b32.xlu0 %v241, 126
    %v243 = vpop.permute.xlu0 %242
    %vm244 = vnez %v243
    %v245 = vsel %vm244, 16843009, 0
    %vm246 = vcmask 8192
    %vm247 = vsmask.f32 256
    %vm248 = vmand %vm246, %vm247
    %v249 = vld [vmem:[#allocation2] sm:$0x1]
    %v250 = vsel %vm248, %v245, %v249
    %251 = vst [vmem:[#allocation2] sm:$0x1] %v250
    // Predicated region
    $region22: #{tpu_custom_call.1} parent=1 // pred_check
      _
    $region23: #{tpu_custom_call.1} parent=1 // pred_check_branch
      %253 = sbr.rel (0) target = $region25
    $region24: #{tpu_custom_call.1} parent=1 // pred_region
      %s255 = ssub.s32 16, 16
      %256 = vsyncadd [#allocation3], %s255
      %s258 = sshll.u32 [#allocation2], 4
      %s259 = int_to_ptr.vmem [resolvable:$true] %s258
      %261 = dma.vmem_to_hbm [thread:$0]  %s259, 16, %s5, [#allocation3]
    $region25: #{tpu_custom_call.1} parent=1 // pred_fallthru
      _
    // Predicated region
    $region26: #{tpu_custom_call.1} parent=1 // pred_check
      _
    $region27: #{tpu_custom_call.1} parent=1 // pred_check_branch
      %263 = sbr.rel (0) target = $region29
    $region28: #{tpu_custom_call.1} parent=1 // pred_region
      %264 = dma.done [#allocation3], 16
    $region29: #{tpu_custom_call.1} parent=1 // pred_fallthru
      _
    %265 = vsyncpa [#allocation3], 1

</llo_original>
